<compile_context>
chip_gen: v7x
topology: tpu7x:2x2x1
jax: 0.10.0
libtpu: 0.0.40
codegen_flags: <defaults>
</compile_context>

<pallas_src>
from functools import partial

import jax
import jax.numpy as jnp
from jax import lax
from jax.experimental import pallas as pl
from jax.experimental.pallas import tpu as pltpu

_LN_EPS = 1e-12
_INV_SQRT2 = 0.7071067811865476


def _erf_approx(x):
    # Abramowitz & Stegun 7.1.26 (|err| < 1.5e-7 ~ f32 eps); exp + reciprocal
    # both go to the EUP slot, off the VALUs.
    a1, a2, a3, a4, a5 = (0.254829592, -0.284496736, 1.421413741,
                          -1.453152027, 1.061405429)
    p = 0.3275911
    s = jnp.where(x >= 0.0, 1.0, -1.0)
    ax = jnp.abs(x)
    t = pl.reciprocal(1.0 + p * ax)          # non-approx: keeps 1e-4 parity
    poly = ((((a5 * t + a4) * t + a3) * t + a2) * t + a1) * t
    return s * (1.0 - poly * jnp.exp(-ax * ax))


def _gelu(x):
    return 0.5 * x * (1.0 + _erf_approx(x * _INV_SQRT2))


def _layer_norm(v, g, b):
    # Matches FMLP's LayerNorm (biased variance over last dim, eps=1e-12).
    u = jnp.mean(v, axis=-1, keepdims=True)
    c = v - u
    s = jnp.mean(c * c, axis=-1, keepdims=True)
    return g * (c * lax.rsqrt(s + _LN_EPS)) + b


def _make_kernel(num_layers):
    """Returns the fused FMLPEncoder kernel for a static layer count."""

    def kernel(x_ref, fwd_ref, inv_ref, filt_ref, w1_ref, b1_ref, w2_ref,
               vec_ref, o_ref):
        Bt, S, H = x_ref.shape
        Kp = fwd_ref.shape[0]                 # padded 2F (sublane aligned)

        # ---- Loop-invariant loads / broadcasts (hoisted once; JAX does not
        # CSE broadcast_in_dim, so keep these outside the layer loop). ----
        fwd_b = jnp.broadcast_to(fwd_ref[...][None], (Bt, Kp, S))      # rfft op
        inv_b = jnp.broadcast_to(inv_ref[...][None], (Bt, S, 2 * Kp))  # irfft op
        wa = filt_ref[0][None]                # (1, Kp, H) = [wr; wr] padded
        wb = filt_ref[1][None]                # (1, Kp, H) = [wi; wi] padded
        w1 = w1_ref[...]                      # (H, I)
        b1 = b1_ref[...]                      # (1, I)
        w2 = w2_ref[...]                      # (I, H)
        vec = vec_ref[...]                    # (5, H)
        ln1g, ln1b = vec[0:1], vec[1:2]
        b2 = vec[2:3]
        ln2g, ln2b = vec[3:4], vec[4:5]

        # batched dot: contract seq/freq, batch over the tile's batch dim
        bdims = (((2,), (1,)), ((0,), (0,)))

        def layer(_, h):
            # h: (Bt*S, H) token-major activation, f32, VMEM/vreg resident.
            h3 = h.reshape(Bt, S, H)          # leading-dim split: layout-free

            # ---- FilterLayer: rfft(ortho) -> complex filter -> irfft(ortho)
            X = lax.dot_general(fwd_b, h3, bdims,
                                preferred_element_type=jnp.float32)   # (Bt,Kp,H)
            Xw = jnp.concatenate([X * wa, X * wb], axis=1)            # (Bt,2Kp,H)
            y = lax.dot_general(inv_b, Xw, bdims,
                                preferred_element_type=jnp.float32)   # (Bt,S,H)
            y = y.reshape(Bt * S, H)
            # dropout = identity (eval mode)
            h = _layer_norm(y + h, ln1g, ln1b)

            # ---- Intermediate: Linear -> gelu(erf) -> Linear -> residual LN
            t = jnp.dot(h.astype(w1.dtype), w1,
                        preferred_element_type=jnp.float32) + b1
            t = _gelu(t)
            t = jnp.dot(t.astype(w2.dtype), w2,
                        preferred_element_type=jnp.float32) + b2
            # dropout = identity (eval mode)
            return _layer_norm(t + h, ln2g, ln2b)

        h0 = x_ref[...].reshape(Bt * S, H)
        h = lax.fori_loop(0, num_layers, layer, h0)
        o_ref[...] = h.reshape(Bt, S, H)

    return kernel


def _dft_matrices(S):
    """Real matrices implementing rfft / irfft with norm='ortho' along seq."""
    F = S // 2 + 1
    t = jnp.arange(S, dtype=jnp.float32)
    f = jnp.arange(F, dtype=jnp.float32)
    ang = 2.0 * jnp.pi * f[:, None] * t[None, :] / S           # (F, S)
    scale = 1.0 / jnp.sqrt(jnp.float32(S))
    fr = jnp.cos(ang) * scale                                  # Re of rfft
    fi = -jnp.sin(ang) * scale                                 # Im of rfft
    idx = jnp.arange(F)
    nyq = (S % 2 == 0) & (idx == S // 2)
    c = jnp.where((idx == 0) | nyq, 1.0, 2.0).astype(jnp.float32)
    gr = (jnp.cos(ang).T * c[None, :]) * scale                 # (S, F)
    gi = (-jnp.sin(ang).T * c[None, :]) * scale                # (S, F)
    return fr, fi, gr, gi


def _round_up(n, m):
    return (n + m - 1) // m * m


@partial(jax.jit, static_argnames=("num_layers", "batch_tile", "use_bf16_mlp"))
def fmlp_encoder(x, params, num_layers, batch_tile=None, use_bf16_mlp=False):
    """FMLPEncoder forward. x: (B, S, H) float32."""
    B, S, H = x.shape
    I = params["w1"].shape[-1]
    if batch_tile is None:
        # grid >= 2 steps: both v7x TensorCores run and DMA overlaps compute.
        batch_tile = B // 2 if (B % 2 == 0 and B >= 2) else B
    Bt = batch_tile
    assert B % Bt == 0

    # --- DFT operators; frequency dim zero-padded to a sublane multiple ---
    fr, fi, gr, gi = _dft_matrices(S)
    F2 = 2 * fr.shape[0]                                     # 2F
    Kp = _round_up(F2, 8)
    pad = Kp - F2

    fwd = jnp.pad(jnp.concatenate([fr, fi], axis=0), ((0, pad), (0, 0)))   # (Kp,S)
    inv_a = jnp.pad(jnp.concatenate([gr, gi], axis=1), ((0, 0), (0, pad)))
    inv_b = jnp.pad(jnp.concatenate([gi, -gr], axis=1), ((0, 0), (0, pad)))
    inv = jnp.concatenate([inv_a, inv_b], axis=1)            # (S, 2Kp) fused irfft

    wa = jnp.pad(jnp.concatenate([params["wr"], params["wr"]], axis=0),
                 ((0, pad), (0, 0)))                          # (Kp, H)
    wb = jnp.pad(jnp.concatenate([params["wi"], params["wi"]], axis=0),
                 ((0, pad), (0, 0)))                          # (Kp, H)
    filt = jnp.stack([wa, wb], axis=0)                        # (2, Kp, H)

    vecs = jnp.concatenate([params["ln1_g"], params["ln1_b"], params["b2"],
                            params["ln2_g"], params["ln2_b"]], axis=0)  # (5, H)

    mlp_dtype = jnp.bfloat16 if use_bf16_mlp else jnp.float32
    w1 = params["w1"].astype(mlp_dtype)                       # (H, I)
    w2 = params["w2"].astype(mlp_dtype)                       # (I, H)
    b1 = params["b1"]                                         # (1, I) f32

    # ModuleList of deepcopies => identical per-layer weights: one copy only,
    # the kernel loops num_layers times over it.
    weights = (fwd, inv, filt, w1, b1, w2, vecs)

    def full_spec(p):
        nd = p.ndim
        return pl.BlockSpec(p.shape, lambda i, _n=nd: (0,) * _n)

    in_specs = [pl.BlockSpec((Bt, S, H), lambda i: (i, 0, 0))]
    in_specs += [full_spec(p) for p in weights]
    out_spec = pl.BlockSpec((Bt, S, H), lambda i: (i, 0, 0))

    # VMEM budget from actual residency: double-buffered in/out activation
    # blocks + double-buffered (grid-invariant) weights + generous margin for
    # live intermediates; clamped to fit v7x's 64 MiB physical VMEM.
    act_bytes = Bt * S * H * 4
    wt_bytes = sum(int(p.size) * p.dtype.itemsize for p in weights)
    live_bytes = 4 * Bt * (2 * S * I + 4 * Kp * H + 4 * S * H + Kp * S + 2 * S * Kp)
    vmem_limit = 2 * (2 * act_bytes + wt_bytes) + live_bytes + (4 << 20)
    vmem_limit = int(min(64 << 20, max(16 << 20, vmem_limit)))

    return pl.pallas_call(
        _make_kernel(num_layers),
        out_shape=jax.ShapeDtypeStruct((B, S, H), jnp.float32),
        grid=(B // Bt,),
        in_specs=in_specs,
        out_specs=out_spec,
        compiler_params=pltpu.CompilerParams(
            dimension_semantics=("parallel",),     # batch axis: megacore-able
            vmem_limit_bytes=vmem_limit),
    )(x, *weights)


def init_params(key, S, H, I):
    """Deterministic synthetic init matching the PyTorch parameter shapes."""
    F = S // 2 + 1
    ks = jax.random.split(key, 6)
    return {
        # complex_weight: torch.randn(1, S//2+1, H, 2) * 0.02
        "wr": 0.02 * jax.random.normal(ks[0], (F, H), jnp.float32),
        "wi": 0.02 * jax.random.normal(ks[1], (F, H), jnp.float32),
        "ln1_g": jnp.ones((1, H), jnp.float32),
        "ln1_b": jnp.zeros((1, H), jnp.float32),
        # dense_1: Linear(H, 4H); dense_2: Linear(4H, H) (stored as x @ W + b)
        "w1": 0.02 * jax.random.normal(ks[2], (H, I), jnp.float32),
        "b1": 0.02 * jax.random.normal(ks[3], (1, I), jnp.float32),
        "w2": 0.02 * jax.random.normal(ks[4], (I, H), jnp.float32),
        "b2": 0.02 * jax.random.normal(ks[5], (1, H), jnp.float32),
        "ln2_g": jnp.ones((1, H), jnp.float32),
        "ln2_b": jnp.zeros((1, H), jnp.float32),
    }


def ref_encoder(x, params, num_layers):
    """Pure-JAX reference (jnp.fft + exact erf) for verification."""
    from jax.scipy.special import erf as jerf

    def ln(v, g, b):
        u = jnp.mean(v, -1, keepdims=True)
        s = jnp.mean((v - u) ** 2, -1, keepdims=True)
        return g * ((v - u) / jnp.sqrt(s + _LN_EPS)) + b

    S = x.shape[1]
    w = params["wr"] + 1j * params["wi"]
    for _ in range(num_layers):
        fx = jnp.fft.rfft(x, axis=1, norm="ortho")
        y = jnp.fft.irfft(fx * w[None], n=S, axis=1, norm="ortho")
        y = y.astype(jnp.float32)
        h = ln(y + x, params["ln1_g"][0], params["ln1_b"][0])
        t = h @ params["w1"] + params["b1"][0]
        t = 0.5 * t * (1.0 + jerf(t * _INV_SQRT2))
        t = t @ params["w2"] + params["b2"][0]
        x = ln(t + h, params["ln2_g"][0], params["ln2_b"][0])
    return x


if __name__ == "__main__":
    B, S, H, NUM_LAYERS = 4, 8, 32, 2        # batch, max_seq_length, hidden_size
    I = 4 * H                                # intermediate size

    key = jax.random.PRNGKey(0)
    kx, kp = jax.random.split(key)
    x = jax.random.normal(kx, (B, S, H), jnp.float32)
    params = init_params(kp, S, H, I)

    # Default batch_tile = B//2 = 2 -> grid=(2,): exercises the batched DFT
    # dots (Bt=2) and a multi-step, megacore-friendly grid.
    out = jax.block_until_ready(fmlp_encoder(x, params, NUM_LAYERS))

    ref = jax.block_until_ready(ref_encoder(x, params, NUM_LAYERS))
    assert out.shape == (B, S, H)
    err = float(jnp.max(jnp.abs(out - ref)))
    assert jnp.allclose(out, ref, atol=1e-4, rtol=1e-4), f"max abs err {err}"
    print("KERNEL_OK")
</pallas_src>

<mosaic_0001>
module attributes {stable_mosaic.version = 11 : i64} {
  func.func @kernel(%arg0: i32, %arg1: memref<2x8x32xf32, #tpu.memory_space<vmem>>, %arg2: memref<16x8xf32, #tpu.memory_space<vmem>>, %arg3: memref<8x32xf32, #tpu.memory_space<vmem>>, %arg4: memref<2x16x32xf32, #tpu.memory_space<vmem>>, %arg5: memref<32x128xf32, #tpu.memory_space<vmem>>, %arg6: memref<1x128xf32, #tpu.memory_space<vmem>>, %arg7: memref<128x32xf32, #tpu.memory_space<vmem>>, %arg8: memref<5x32xf32, #tpu.memory_space<vmem>>, %arg9: memref<2x8x32xf32, #tpu.memory_space<vmem>>) attributes {dimension_semantics = [#tpu.dimension_semantics<parallel>], iteration_bounds = array<i64: 2>, scalar_prefetch = 0 : i64, scratch_operands = 0 : i64, tpu.core_type = #tpu.core_type<tc>, window_params = [{transform_indices = @transform_0, window_bounds = array<i64: 2, 8, 32>}, {pipeline_mode = #tpu.pipeline_mode<synchronous>, transform_indices = @transform_1, window_bounds = array<i64: 16, 8>}, {pipeline_mode = #tpu.pipeline_mode<synchronous>, transform_indices = @transform_2, window_bounds = array<i64: 8, 32>}, {pipeline_mode = #tpu.pipeline_mode<synchronous>, transform_indices = @transform_3, window_bounds = array<i64: 2, 16, 32>}, {pipeline_mode = #tpu.pipeline_mode<synchronous>, transform_indices = @transform_4, window_bounds = array<i64: 32, 128>}, {pipeline_mode = #tpu.pipeline_mode<synchronous>, transform_indices = @transform_5, window_bounds = array<i64: 1, 128>}, {pipeline_mode = #tpu.pipeline_mode<synchronous>, transform_indices = @transform_6, window_bounds = array<i64: 128, 32>}, {pipeline_mode = #tpu.pipeline_mode<synchronous>, transform_indices = @transform_7, window_bounds = array<i64: 5, 32>}, {transform_indices = @transform_8, window_bounds = array<i64: 2, 8, 32>}]} {
    %c0 = arith.constant 0 : index
    %c0_0 = arith.constant 0 : index
    %0 = vector.load %arg2[%c0, %c0_0] : memref<16x8xf32, #tpu.memory_space<vmem>>, vector<16x8xf32>
    %1 = vector.shape_cast %0 : vector<16x8xf32> to vector<1x16x8xf32>
    %2 = vector.shape_cast %1 : vector<1x16x8xf32> to vector<1x16x8xf32>
    %3 = vector.broadcast %2 : vector<1x16x8xf32> to vector<2x16x8xf32>
    %c0_1 = arith.constant 0 : index
    %c0_2 = arith.constant 0 : index
    %4 = vector.load %arg3[%c0_1, %c0_2] : memref<8x32xf32, #tpu.memory_space<vmem>>, vector<8x32xf32>
    %5 = vector.shape_cast %4 : vector<8x32xf32> to vector<1x8x32xf32>
    %6 = vector.shape_cast %5 : vector<1x8x32xf32> to vector<1x8x32xf32>
    %7 = vector.broadcast %6 : vector<1x8x32xf32> to vector<2x8x32xf32>
    %c0_3 = arith.constant 0 : index
    %c0_4 = arith.constant 0 : index
    %c0_5 = arith.constant 0 : index
    %8 = vector.load %arg4[%c0_3, %c0_4, %c0_5] : memref<2x16x32xf32, #tpu.memory_space<vmem>>, vector<1x16x32xf32>
    %9 = vector.shape_cast %8 : vector<1x16x32xf32> to vector<16x32xf32>
    %10 = vector.shape_cast %9 : vector<16x32xf32> to vector<1x16x32xf32>
    %c1 = arith.constant 1 : index
    %c0_6 = arith.constant 0 : index
    %c0_7 = arith.constant 0 : index
    %11 = vector.load %arg4[%c1, %c0_6, %c0_7] : memref<2x16x32xf32, #tpu.memory_space<vmem>>, vector<1x16x32xf32>
    %12 = vector.shape_cast %11 : vector<1x16x32xf32> to vector<16x32xf32>
    %13 = vector.shape_cast %12 : vector<16x32xf32> to vector<1x16x32xf32>
    %c0_8 = arith.constant 0 : index
    %c0_9 = arith.constant 0 : index
    %14 = vector.load %arg5[%c0_8, %c0_9] : memref<32x128xf32, #tpu.memory_space<vmem>>, vector<32x128xf32>
    %c0_10 = arith.constant 0 : index
    %c0_11 = arith.constant 0 : index
    %15 = vector.load %arg6[%c0_10, %c0_11] : memref<1x128xf32, #tpu.memory_space<vmem>>, vector<1x128xf32>
    %c0_12 = arith.constant 0 : index
    %c0_13 = arith.constant 0 : index
    %16 = vector.load %arg7[%c0_12, %c0_13] : memref<128x32xf32, #tpu.memory_space<vmem>>, vector<128x32xf32>
    %c0_14 = arith.constant 0 : index
    %c0_15 = arith.constant 0 : index
    %17 = vector.load %arg8[%c0_14, %c0_15] : memref<5x32xf32, #tpu.memory_space<vmem>>, vector<5x32xf32>
    %18 = vector.extract_strided_slice %17 {offsets = [0, 0], sizes = [1, 32], strides = [1, 1]} : vector<5x32xf32> to vector<1x32xf32>
    %19 = vector.extract_strided_slice %17 {offsets = [1, 0], sizes = [1, 32], strides = [1, 1]} : vector<5x32xf32> to vector<1x32xf32>
    %20 = vector.extract_strided_slice %17 {offsets = [2, 0], sizes = [1, 32], strides = [1, 1]} : vector<5x32xf32> to vector<1x32xf32>
    %21 = vector.extract_strided_slice %17 {offsets = [3, 0], sizes = [1, 32], strides = [1, 1]} : vector<5x32xf32> to vector<1x32xf32>
    %22 = vector.extract_strided_slice %17 {offsets = [4, 0], sizes = [1, 32], strides = [1, 1]} : vector<5x32xf32> to vector<1x32xf32>
    %c0_16 = arith.constant 0 : index
    %c0_17 = arith.constant 0 : index
    %c0_18 = arith.constant 0 : index
    %23 = vector.load %arg1[%c0_16, %c0_17, %c0_18] : memref<2x8x32xf32, #tpu.memory_space<vmem>>, vector<2x8x32xf32>
    %24 = vector.shape_cast %23 : vector<2x8x32xf32> to vector<16x32xf32>
    %c0_i32 = arith.constant 0 : i32
    %c2_i32 = arith.constant 2 : i32
    %25 = arith.addi %c0_i32, %c2_i32 : i32
    %c1_i32 = arith.constant 1 : i32
    %26 = scf.for %arg10 = %c0_i32 to %25 step %c1_i32 iter_args(%arg11 = %24) -> (vector<16x32xf32>)  : i32 {
      %29 = vector.shape_cast %arg11 : vector<16x32xf32> to vector<2x8x32xf32>
      %cst = arith.constant dense<0.000000e+00> : vector<2x16x32xf32>
      %30 = tpu.matmul %3, %29, %cst {dimension_numbers = #tpu.dot_dimension_numbers<[2], [1], [1], [2], [0, 0, 0, 1, 1, 2], [0], [0]>} : vector<2x16x8xf32>, vector<2x8x32xf32>, vector<2x16x32xf32> -> vector<2x16x32xf32>
      %31 = vector.broadcast %10 : vector<1x16x32xf32> to vector<2x16x32xf32>
      %32 = arith.mulf %30, %31 : vector<2x16x32xf32>
      %33 = vector.broadcast %13 : vector<1x16x32xf32> to vector<2x16x32xf32>
      %34 = arith.mulf %30, %33 : vector<2x16x32xf32>
      %35 = tpu.concatenate %32, %34 in 1 : vector<2x16x32xf32>, vector<2x16x32xf32> -> vector<2x32x32xf32>
      %cst_22 = arith.constant dense<0.000000e+00> : vector<2x8x32xf32>
      %36 = tpu.matmul %7, %35, %cst_22 {dimension_numbers = #tpu.dot_dimension_numbers<[2], [1], [1], [2], [0, 0, 0, 1, 1, 2], [0], [0]>} : vector<2x8x32xf32>, vector<2x32x32xf32>, vector<2x8x32xf32> -> vector<2x8x32xf32>
      %37 = vector.shape_cast %36 : vector<2x8x32xf32> to vector<16x32xf32>
      %38 = arith.addf %37, %arg11 : vector<16x32xf32>
      %cst_23 = arith.constant dense<0.000000e+00> : vector<16xf32>
      %39 = vector.multi_reduction <add>, %38, %cst_23 [1] : vector<16x32xf32> to vector<16xf32>
      %40 = vector.shape_cast %39 : vector<16xf32> to vector<16x1xf32>
      %cst_24 = arith.constant 3.200000e+01 : f32
      %41 = vector.broadcast %cst_24 : f32 to vector<16x1xf32>
      %42 = arith.divf %40, %41 : vector<16x1xf32>
      %43 = vector.broadcast %42 : vector<16x1xf32> to vector<16x32xf32>
      %44 = arith.subf %38, %43 : vector<16x32xf32>
      %45 = arith.mulf %44, %44 : vector<16x32xf32>
      %cst_25 = arith.constant dense<0.000000e+00> : vector<16xf32>
      %46 = vector.multi_reduction <add>, %45, %cst_25 [1] : vector<16x32xf32> to vector<16xf32>
      %47 = vector.shape_cast %46 : vector<16xf32> to vector<16x1xf32>
      %cst_26 = arith.constant 3.200000e+01 : f32
      %48 = vector.broadcast %cst_26 : f32 to vector<16x1xf32>
      %49 = arith.divf %47, %48 : vector<16x1xf32>
      %cst_27 = arith.constant 9.99999996E-13 : f32
      %50 = vector.broadcast %cst_27 : f32 to vector<16x1xf32>
      %51 = arith.addf %49, %50 : vector<16x1xf32>
      %52 = math.rsqrt %51 : vector<16x1xf32>
      %53 = vector.broadcast %52 : vector<16x1xf32> to vector<16x32xf32>
      %54 = arith.mulf %44, %53 : vector<16x32xf32>
      %55 = vector.broadcast %18 : vector<1x32xf32> to vector<16x32xf32>
      %56 = arith.mulf %55, %54 : vector<16x32xf32>
      %57 = vector.broadcast %19 : vector<1x32xf32> to vector<16x32xf32>
      %58 = arith.addf %56, %57 : vector<16x32xf32>
      %cst_28 = arith.constant dense<0.000000e+00> : vector<16x128xf32>
      %59 = tpu.matmul %58, %14, %cst_28 {dimension_numbers = #tpu.dot_dimension_numbers<[1], [0], [0], [1], [0, 0, 1, 1], [], []>} : vector<16x32xf32>, vector<32x128xf32>, vector<16x128xf32> -> vector<16x128xf32>
      %60 = vector.broadcast %15 : vector<1x128xf32> to vector<16x128xf32>
      %61 = arith.addf %59, %60 : vector<16x128xf32>
      %cst_29 = arith.constant 5.000000e-01 : f32
      %62 = vector.broadcast %cst_29 : f32 to vector<16x128xf32>
      %63 = arith.mulf %62, %61 : vector<16x128xf32>
      %cst_30 = arith.constant 0.707106769 : f32
      %64 = vector.broadcast %cst_30 : f32 to vector<16x128xf32>
      %65 = arith.mulf %61, %64 : vector<16x128xf32>
      %cst_31 = arith.constant 0.000000e+00 : f32
      %66 = vector.broadcast %cst_31 : f32 to vector<16x128xf32>
      %67 = arith.cmpf oge, %65, %66 : vector<16x128xf32>
      %cst_32 = arith.constant 1.000000e+00 : f32
      %cst_33 = arith.constant -1.000000e+00 : f32
      %68 = vector.broadcast %cst_32 : f32 to vector<16x128xf32>
      %69 = vector.broadcast %cst_33 : f32 to vector<16x128xf32>
      %70 = arith.select %67, %68, %69 : vector<16x128xi1>, vector<16x128xf32>
      %71 = math.absf %65 : vector<16x128xf32>
      %cst_34 = arith.constant 0.327591091 : f32
      %72 = vector.broadcast %cst_34 : f32 to vector<16x128xf32>
      %73 = arith.mulf %72, %71 : vector<16x128xf32>
      %cst_35 = arith.constant 1.000000e+00 : f32
      %74 = vector.broadcast %cst_35 : f32 to vector<16x128xf32>
      %75 = arith.addf %74, %73 : vector<16x128xf32>
      %76 = tpu.reciprocal %75 : vector<16x128xf32> -> vector<16x128xf32>
      %cst_36 = arith.constant 1.06140542 : f32
      %77 = vector.broadcast %cst_36 : f32 to vector<16x128xf32>
      %78 = arith.mulf %77, %76 : vector<16x128xf32>
      %cst_37 = arith.constant -1.45315206 : f32
      %79 = vector.broadcast %cst_37 : f32 to vector<16x128xf32>
      %80 = arith.addf %78, %79 : vector<16x128xf32>
      %81 = arith.mulf %80, %76 : vector<16x128xf32>
      %cst_38 = arith.constant 1.42141378 : f32
      %82 = vector.broadcast %cst_38 : f32 to vector<16x128xf32>
      %83 = arith.addf %81, %82 : vector<16x128xf32>
      %84 = arith.mulf %83, %76 : vector<16x128xf32>
      %cst_39 = arith.constant -0.284496725 : f32
      %85 = vector.broadcast %cst_39 : f32 to vector<16x128xf32>
      %86 = arith.addf %84, %85 : vector<16x128xf32>
      %87 = arith.mulf %86, %76 : vector<16x128xf32>
      %cst_40 = arith.constant 0.254829586 : f32
      %88 = vector.broadcast %cst_40 : f32 to vector<16x128xf32>
      %89 = arith.addf %87, %88 : vector<16x128xf32>
      %90 = arith.mulf %89, %76 : vector<16x128xf32>
      %cst_41 = arith.constant 0.000000e+00 : f32
      %91 = vector.broadcast %cst_41 : f32 to vector<16x128xf32>
      %92 = arith.subf %91, %71 : vector<16x128xf32>
      %93 = arith.mulf %92, %71 : vector<16x128xf32>
      %94 = math.exp %93 : vector<16x128xf32>
      %95 = arith.mulf %90, %94 : vector<16x128xf32>
      %cst_42 = arith.constant 1.000000e+00 : f32
      %96 = vector.broadcast %cst_42 : f32 to vector<16x128xf32>
      %97 = arith.subf %96, %95 : vector<16x128xf32>
      %98 = arith.mulf %70, %97 : vector<16x128xf32>
      %cst_43 = arith.constant 1.000000e+00 : f32
      %99 = vector.broadcast %cst_43 : f32 to vector<16x128xf32>
      %100 = arith.addf %99, %98 : vector<16x128xf32>
      %101 = arith.mulf %63, %100 : vector<16x128xf32>
      %cst_44 = arith.constant dense<0.000000e+00> : vector<16x32xf32>
      %102 = tpu.matmul %101, %16, %cst_44 {dimension_numbers = #tpu.dot_dimension_numbers<[1], [0], [0], [1], [0, 0, 1, 1], [], []>} : vector<16x128xf32>, vector<128x32xf32>, vector<16x32xf32> -> vector<16x32xf32>
      %103 = vector.broadcast %20 : vector<1x32xf32> to vector<16x32xf32>
      %104 = arith.addf %102, %103 : vector<16x32xf32>
      %105 = arith.addf %104, %58 : vector<16x32xf32>
      %cst_45 = arith.constant dense<0.000000e+00> : vector<16xf32>
      %106 = vector.multi_reduction <add>, %105, %cst_45 [1] : vector<16x32xf32> to vector<16xf32>
      %107 = vector.shape_cast %106 : vector<16xf32> to vector<16x1xf32>
      %cst_46 = arith.constant 3.200000e+01 : f32
      %108 = vector.broadcast %cst_46 : f32 to vector<16x1xf32>
      %109 = arith.divf %107, %108 : vector<16x1xf32>
      %110 = vector.broadcast %109 : vector<16x1xf32> to vector<16x32xf32>
      %111 = arith.subf %105, %110 : vector<16x32xf32>
      %112 = arith.mulf %111, %111 : vector<16x32xf32>
      %cst_47 = arith.constant dense<0.000000e+00> : vector<16xf32>
      %113 = vector.multi_reduction <add>, %112, %cst_47 [1] : vector<16x32xf32> to vector<16xf32>
      %114 = vector.shape_cast %113 : vector<16xf32> to vector<16x1xf32>
      %cst_48 = arith.constant 3.200000e+01 : f32
      %115 = vector.broadcast %cst_48 : f32 to vector<16x1xf32>
      %116 = arith.divf %114, %115 : vector<16x1xf32>
      %cst_49 = arith.constant 9.99999996E-13 : f32
      %117 = vector.broadcast %cst_49 : f32 to vector<16x1xf32>
      %118 = arith.addf %116, %117 : vector<16x1xf32>
      %119 = math.rsqrt %118 : vector<16x1xf32>
      %120 = vector.broadcast %119 : vector<16x1xf32> to vector<16x32xf32>
      %121 = arith.mulf %111, %120 : vector<16x32xf32>
      %122 = vector.broadcast %21 : vector<1x32xf32> to vector<16x32xf32>
      %123 = arith.mulf %122, %121 : vector<16x32xf32>
      %124 = vector.broadcast %22 : vector<1x32xf32> to vector<16x32xf32>
      %125 = arith.addf %123, %124 : vector<16x32xf32>
      scf.yield %125 : vector<16x32xf32>
    }
    %27 = vector.shape_cast %26 : vector<16x32xf32> to vector<2x8x32xf32>
    %c0_19 = arith.constant 0 : index
    %c0_20 = arith.constant 0 : index
    %c0_21 = arith.constant 0 : index
    %28 = vector.load %arg9[%c0_19, %c0_20, %c0_21] : memref<2x8x32xf32, #tpu.memory_space<vmem>>, vector<2x8x32xf32>
    tpu.vector_store %arg9[%c0_19, %c0_20, %c0_21], %27 {strides = array<i32>} : memref<2x8x32xf32, #tpu.memory_space<vmem>>, vector<2x8x32xf32>,
    return
  }
  func.func @transform_0(%arg0: i32) -> (i32, i32, i32) {
    %c0_i32 = arith.constant 0 : i32
    %c0_i32_0 = arith.constant 0 : i32
    %c0_i32_1 = arith.constant 0 : i32
    return %arg0, %c0_i32, %c0_i32_0 : i32, i32, i32
  }
  func.func @transform_1(%arg0: i32) -> (i32, i32) {
    %c0_i32 = arith.constant 0 : i32
    %c0_i32_0 = arith.constant 0 : i32
    %c0_i32_1 = arith.constant 0 : i32
    return %c0_i32, %c0_i32_0 : i32, i32
  }
  func.func @transform_2(%arg0: i32) -> (i32, i32) {
    %c0_i32 = arith.constant 0 : i32
    %c0_i32_0 = arith.constant 0 : i32
    %c0_i32_1 = arith.constant 0 : i32
    return %c0_i32, %c0_i32_0 : i32, i32
  }
  func.func @transform_3(%arg0: i32) -> (i32, i32, i32) {
    %c0_i32 = arith.constant 0 : i32
    %c0_i32_0 = arith.constant 0 : i32
    %c0_i32_1 = arith.constant 0 : i32
    %c0_i32_2 = arith.constant 0 : i32
    return %c0_i32, %c0_i32_0, %c0_i32_1 : i32, i32, i32
  }
  func.func @transform_4(%arg0: i32) -> (i32, i32) {
    %c0_i32 = arith.constant 0 : i32
    %c0_i32_0 = arith.constant 0 : i32
    %c0_i32_1 = arith.constant 0 : i32
    return %c0_i32, %c0_i32_0 : i32, i32
  }
  func.func @transform_5(%arg0: i32) -> (i32, i32) {
    %c0_i32 = arith.constant 0 : i32
    %c0_i32_0 = arith.constant 0 : i32
    %c0_i32_1 = arith.constant 0 : i32
    return %c0_i32, %c0_i32_0 : i32, i32
  }
  func.func @transform_6(%arg0: i32) -> (i32, i32) {
    %c0_i32 = arith.constant 0 : i32
    %c0_i32_0 = arith.constant 0 : i32
    %c0_i32_1 = arith.constant 0 : i32
    return %c0_i32, %c0_i32_0 : i32, i32
  }
  func.func @transform_7(%arg0: i32) -> (i32, i32) {
    %c0_i32 = arith.constant 0 : i32
    %c0_i32_0 = arith.constant 0 : i32
    %c0_i32_1 = arith.constant 0 : i32
    return %c0_i32, %c0_i32_0 : i32, i32
  }
  func.func @transform_8(%arg0: i32) -> (i32, i32, i32) {
    %c0_i32 = arith.constant 0 : i32
    %c0_i32_0 = arith.constant 0 : i32
    %c0_i32_1 = arith.constant 0 : i32
    return %arg0, %c0_i32, %c0_i32_0 : i32, i32, i32
  }
}

</mosaic_0001>

<llo_original>
// kernel: fmlp_encoder.1
$region0: #{fmlp_encoder.1}
  #allocation0 [shape = 'u32[]', space=smem, size = 0x4, offset = 0x4, fixed_abs, tag = 'smem constant byte address 0x4 - core index']
  #allocation1 [shape = 'u32[144,128]{1,0:T(1,128)}', space=vmem, size = 0x12000, scoped, tag = 'internal scratch']
  %s0 = inlined_call_operand.vmem [shape: f32[4,8,32], index: 0, kind: input, shape index: {}]
  %s1 = inlined_call_operand.vmem [shape: f32[16,8], index: 1, kind: input, shape index: {}]
  %s2 = inlined_call_operand.vmem [shape: f32[8,32], index: 2, kind: input, shape index: {}]
  %s3 = inlined_call_operand.vmem [shape: f32[2,16,32], index: 3, kind: input, shape index: {}]
  %s4 = inlined_call_operand.vmem [shape: f32[32,128], index: 4, kind: input, shape index: {}]
  %s5 = inlined_call_operand.vmem [shape: f32[1,128], index: 5, kind: input, shape index: {}]
  %s6 = inlined_call_operand.vmem [shape: f32[128,32], index: 6, kind: input, shape index: {}]
  %s7 = inlined_call_operand.vmem [shape: f32[5,32], index: 7, kind: input, shape index: {}]
  %s8 = inlined_call_operand.hbm [shape: f32[4,8,32], index: 8, kind: output, shape index: {}]
  %s9 = sld [smem:[#allocation0]]
  $region72: #{fmlp_encoder.1} parent=0
    _
  %s11 = ssub.s32 1, %s9
  %s12 = scalar_select 0, %s11, %s9
  $region1: #{fmlp_encoder.1} parent=0
    #allocation2 [shape = 'u8[16384]{0}', space=vmem, size = 0x4000, scoped, tag = 'output window, operand 0']
    #allocation3 [shape = 's32[2]{0}', space=sflag, size = 0x8, scoped, tag = 'scoped memory for fmlp_encoder.1']
    %13 = vsyncpa [#allocation3], 0
    %s14 = scalar_lea.sflag [#allocation3], 1
    %15 = vsyncpa %s14, 0
    loop: start=0, step=1, limit=4
    $region2: #{fmlp_encoder.1} parent=1 // loop_pre_header
      _
    $region3: #{fmlp_encoder.1} parent=1 // loop_header
      %s17 = sphi 0, %s21
      %p18 = scmp.ge.s32.totalorder %s17, 4
      %s27 = sphi 0, %s29
      %s30 = sphi 0, %s27
      %s31 = sphi 0, %s30
      %s47 = sphi 0, %s31
      %s51 = sphi 0, %s51
      %s53 = sphi 0, %s51
      %s54 = sphi 0, %s53
      %s68 = sphi 0, %s54
      %s72 = sphi 0, %s72
      %s74 = sphi 0, %s72
      %s75 = sphi 0, %s74
      %s89 = sphi 0, %s75
      %s93 = sphi 0, %s93
      %s95 = sphi 0, %s93
      %s96 = sphi 0, %s95
      %s110 = sphi 0, %s96
      %s114 = sphi 0, %s114
      %s116 = sphi 0, %s114
      %s117 = sphi 0, %s116
      %s131 = sphi 0, %s117
      %s135 = sphi 0, %s135
      %s137 = sphi 0, %s135
      %s138 = sphi 0, %s137
      %s152 = sphi 0, %s138
      %s156 = sphi 0, %s156
      %s158 = sphi 0, %s156
      %s159 = sphi 0, %s158
      %s173 = sphi 0, %s159
      %s177 = sphi 0, %s177
      %s179 = sphi 0, %s177
      %s180 = sphi 0, %s179
      %s194 = sphi 0, %s180
      %s200 = sphi 0, %s202
      %s203 = sphi 0, %s200
      %s204 = sphi 0, %s203
      %s220 = sphi 0, %s204
    $region4: #{fmlp_encoder.1} parent=1 // loop_header_branch
      %20 = sbr.rel (%p18) target = $region8
    $region5: #{fmlp_encoder.1} parent=1 // loop_body
      %s22 = ssub.s32 %s17, 1
      %s23 = ssub.s32 %s17, 2
      %s24 = sadd.s32 %s17, 1
      %s25 = ssub.s32 %s17, %s24
      %p26 = scmp.eq.s32.totalorder %s25, 0
      %s28 = sadd.s32 %s27, 1
      %s29 = scalar_select %p26, %s27, %s28
      %p32 = pneg %p26
      %p33 = scmp.eq.s32.totalorder %s17, 1
      %p34 = por %p32, %p33
      %p35 = scmp.ne.s32.totalorder %s27, %s30
      %p36 = scmp.eq.s32.totalorder %s17, 0
      %p37 = por %p35, %p36
      %p38 = scmp.ne.s32.totalorder %s27, %s30
      %p39 = scmp.eq.s32.totalorder %s22, 1
      %p40 = por %p38, %p39
      %p41 = scmp.ne.s32.totalorder %s30, %s31
      %p42 = scmp.eq.s32.totalorder %s22, 0
      %p43 = por %p41, %p42
      %p44 = scmp.ne.s32.totalorder %s30, %s31
      %p45 = scmp.eq.s32.totalorder %s23, 1
      %p46 = por %p44, %p45
      %p48 = scmp.ne.s32.totalorder %s31, %s47
      %p49 = scmp.eq.s32.totalorder %s23, 0
      %p50 = por %p48, %p49
      %s52 = sadd.s32 %s51, 1
      %p55 = scmp.eq.s32.totalorder %s17, 1
      %p56 = scmp.ne.s32.totalorder %s51, %s53
      %p57 = scmp.eq.s32.totalorder %s17, 0
      %p58 = por %p56, %p57
      %p59 = scmp.ne.s32.totalorder %s51, %s53
      %p60 = scmp.eq.s32.totalorder %s22, 1
      %p61 = por %p59, %p60
      %p62 = scmp.ne.s32.totalorder %s53, %s54
      %p63 = scmp.eq.s32.totalorder %s22, 0
      %p64 = por %p62, %p63
      %p65 = scmp.ne.s32.totalorder %s53, %s54
      %p66 = scmp.eq.s32.totalorder %s23, 1
      %p67 = por %p65, %p66
      %p69 = scmp.ne.s32.totalorder %s54, %s68
      %p70 = scmp.eq.s32.totalorder %s23, 0
      %p71 = por %p69, %p70
      %s73 = sadd.s32 %s72, 1
      %p76 = scmp.eq.s32.totalorder %s17, 1
      %p77 = scmp.ne.s32.totalorder %s72, %s74
      %p78 = scmp.eq.s32.totalorder %s17, 0
      %p79 = por %p77, %p78
      %p80 = scmp.ne.s32.totalorder %s72, %s74
      %p81 = scmp.eq.s32.totalorder %s22, 1
      %p82 = por %p80, %p81
      %p83 = scmp.ne.s32.totalorder %s74, %s75
      %p84 = scmp.eq.s32.totalorder %s22, 0
      %p85 = por %p83, %p84
      %p86 = scmp.ne.s32.totalorder %s74, %s75
      %p87 = scmp.eq.s32.totalorder %s23, 1
      %p88 = por %p86, %p87
      %p90 = scmp.ne.s32.totalorder %s75, %s89
      %p91 = scmp.eq.s32.totalorder %s23, 0
      %p92 = por %p90, %p91
      %s94 = sadd.s32 %s93, 1
      %p97 = scmp.eq.s32.totalorder %s17, 1
      %p98 = scmp.ne.s32.totalorder %s93, %s95
      %p99 = scmp.eq.s32.totalorder %s17, 0
      %p100 = por %p98, %p99
      %p101 = scmp.ne.s32.totalorder %s93, %s95
      %p102 = scmp.eq.s32.totalorder %s22, 1
      %p103 = por %p101, %p102
      %p104 = scmp.ne.s32.totalorder %s95, %s96
      %p105 = scmp.eq.s32.totalorder %s22, 0
      %p106 = por %p104, %p105
      %p107 = scmp.ne.s32.totalorder %s95, %s96
      %p108 = scmp.eq.s32.totalorder %s23, 1
      %p109 = por %p107, %p108
      %p111 = scmp.ne.s32.totalorder %s96, %s110
      %p112 = scmp.eq.s32.totalorder %s23, 0
      %p113 = por %p111, %p112
      %s115 = sadd.s32 %s114, 1
      %p118 = scmp.eq.s32.totalorder %s17, 1
      %p119 = scmp.ne.s32.totalorder %s114, %s116
      %p120 = scmp.eq.s32.totalorder %s17, 0
      %p121 = por %p119, %p120
      %p122 = scmp.ne.s32.totalorder %s114, %s116
      %p123 = scmp.eq.s32.totalorder %s22, 1
      %p124 = por %p122, %p123
      %p125 = scmp.ne.s32.totalorder %s116, %s117
      %p126 = scmp.eq.s32.totalorder %s22, 0
      %p127 = por %p125, %p126
      %p128 = scmp.ne.s32.totalorder %s116, %s117
      %p129 = scmp.eq.s32.totalorder %s23, 1
      %p130 = por %p128, %p129
      %p132 = scmp.ne.s32.totalorder %s117, %s131
      %p133 = scmp.eq.s32.totalorder %s23, 0
      %p134 = por %p132, %p133
      %s136 = sadd.s32 %s135, 1
      %p139 = scmp.eq.s32.totalorder %s17, 1
      %p140 = scmp.ne.s32.totalorder %s135, %s137
      %p141 = scmp.eq.s32.totalorder %s17, 0
      %p142 = por %p140, %p141
      %p143 = scmp.ne.s32.totalorder %s135, %s137
      %p144 = scmp.eq.s32.totalorder %s22, 1
      %p145 = por %p143, %p144
      %p146 = scmp.ne.s32.totalorder %s137, %s138
      %p147 = scmp.eq.s32.totalorder %s22, 0
      %p148 = por %p146, %p147
      %p149 = scmp.ne.s32.totalorder %s137, %s138
      %p150 = scmp.eq.s32.totalorder %s23, 1
      %p151 = por %p149, %p150
      %p153 = scmp.ne.s32.totalorder %s138, %s152
      %p154 = scmp.eq.s32.totalorder %s23, 0
      %p155 = por %p153, %p154
      %s157 = sadd.s32 %s156, 1
      %p160 = scmp.eq.s32.totalorder %s17, 1
      %p161 = scmp.ne.s32.totalorder %s156, %s158
      %p162 = scmp.eq.s32.totalorder %s17, 0
      %p163 = por %p161, %p162
      %p164 = scmp.ne.s32.totalorder %s156, %s158
      %p165 = scmp.eq.s32.totalorder %s22, 1
      %p166 = por %p164, %p165
      %p167 = scmp.ne.s32.totalorder %s158, %s159
      %p168 = scmp.eq.s32.totalorder %s22, 0
      %p169 = por %p167, %p168
      %p170 = scmp.ne.s32.totalorder %s158, %s159
      %p171 = scmp.eq.s32.totalorder %s23, 1
      %p172 = por %p170, %p171
      %p174 = scmp.ne.s32.totalorder %s159, %s173
      %p175 = scmp.eq.s32.totalorder %s23, 0
      %p176 = por %p174, %p175
      %s178 = sadd.s32 %s177, 1
      %p181 = scmp.eq.s32.totalorder %s17, 1
      %p182 = scmp.ne.s32.totalorder %s177, %s179
      %p183 = scmp.eq.s32.totalorder %s17, 0
      %p184 = por %p182, %p183
      %p185 = scmp.ne.s32.totalorder %s177, %s179
      %p186 = scmp.eq.s32.totalorder %s22, 1
      %p187 = por %p185, %p186
      %p188 = scmp.ne.s32.totalorder %s179, %s180
      %p189 = scmp.eq.s32.totalorder %s22, 0
      %p190 = por %p188, %p189
      %p191 = scmp.ne.s32.totalorder %s179, %s180
      %p192 = scmp.eq.s32.totalorder %s23, 1
      %p193 = por %p191, %p192
      %p195 = scmp.ne.s32.totalorder %s180, %s194
      %p196 = scmp.eq.s32.totalorder %s23, 0
      %p197 = por %p195, %p196
      %s198 = ssub.s32 %s17, %s24
      %p199 = scmp.eq.s32.totalorder %s198, 0
      %s201 = sadd.s32 %s200, 1
      %s202 = scalar_select %p199, %s200, %s201
      %p205 = pneg %p199
      %p206 = scmp.eq.s32.totalorder %s17, 1
      %p207 = por %p205, %p206
      %p208 = scmp.ne.s32.totalorder %s200, %s203
      %p209 = scmp.eq.s32.totalorder %s17, 0
      %p210 = por %p208, %p209
      %p211 = scmp.ne.s32.totalorder %s200, %s203
      %p212 = scmp.eq.s32.totalorder %s22, 1
      %p213 = por %p211, %p212
      %p214 = scmp.ne.s32.totalorder %s203, %s204
      %p215 = scmp.eq.s32.totalorder %s22, 0
      %p216 = por %p214, %p215
      %p217 = scmp.ne.s32.totalorder %s203, %s204
      %p218 = scmp.eq.s32.totalorder %s23, 1
      %p219 = por %p217, %p218
      %p221 = scmp.ne.s32.totalorder %s204, %s220
      %p222 = scmp.eq.s32.totalorder %s23, 0
      %p223 = por %p221, %p222
      %p224 = scmp.le.s32.totalorder 1, %s17
      %p225 = scmp.lt.s32.totalorder %s17, 3
      %p226 = pnand %p224, %p225
      %p227 = pneg %p226
      // Predicated region
      $region9: #{fmlp_encoder.1} parent=5 // pred_check
        _
      $region10: #{fmlp_encoder.1} parent=5 // pred_check_branch
        %229 = sbr.rel (%p226) target = $region12
      $region11: #{fmlp_encoder.1} parent=5 // pred_region
        %s230 = ssub.s32 %s17, 1
        // Predicated region
        $region13: #{fmlp_encoder.1} parent=11 // pred_check
          %p231 = pneg %p64
        $region14: #{fmlp_encoder.1} parent=11 // pred_check_branch
          %233 = sbr.rel (%p231) target = $region16
        $region15: #{fmlp_encoder.1} parent=11 // pred_region
          _
        $region16: #{fmlp_encoder.1} parent=11 // pred_fallthru
          _
        // Predicated region
        $region17: #{fmlp_encoder.1} parent=11 // pred_check
          %p234 = pneg %p85
        $region18: #{fmlp_encoder.1} parent=11 // pred_check_branch
          %236 = sbr.rel (%p234) target = $region20
        $region19: #{fmlp_encoder.1} parent=11 // pred_region
          _
        $region20: #{fmlp_encoder.1} parent=11 // pred_fallthru
          _
        // Predicated region
        $region21: #{fmlp_encoder.1} parent=11 // pred_check
          %p237 = pneg %p106
        $region22: #{fmlp_encoder.1} parent=11 // pred_check_branch
          %239 = sbr.rel (%p237) target = $region24
        $region23: #{fmlp_encoder.1} parent=11 // pred_region
          _
        $region24: #{fmlp_encoder.1} parent=11 // pred_fallthru
          _
        // Predicated region
        $region25: #{fmlp_encoder.1} parent=11 // pred_check
          %p240 = pneg %p127
        $region26: #{fmlp_encoder.1} parent=11 // pred_check_branch
          %242 = sbr.rel (%p240) target = $region28
        $region27: #{fmlp_encoder.1} parent=11 // pred_region
          _
        $region28: #{fmlp_encoder.1} parent=11 // pred_fallthru
          _
        // Predicated region
        $region29: #{fmlp_encoder.1} parent=11 // pred_check
          %p243 = pneg %p148
        $region30: #{fmlp_encoder.1} parent=11 // pred_check_branch
          %245 = sbr.rel (%p243) target = $region32
        $region31: #{fmlp_encoder.1} parent=11 // pred_region
          _
        $region32: #{fmlp_encoder.1} parent=11 // pred_fallthru
          _
        // Predicated region
        $region33: #{fmlp_encoder.1} parent=11 // pred_check
          %p246 = pneg %p169
        $region34: #{fmlp_encoder.1} parent=11 // pred_check_branch
          %248 = sbr.rel (%p246) target = $region36
        $region35: #{fmlp_encoder.1} parent=11 // pred_region
          _
        $region36: #{fmlp_encoder.1} parent=11 // pred_fallthru
          _
        // Predicated region
        $region37: #{fmlp_encoder.1} parent=11 // pred_check
          %p249 = pneg %p190
        $region38: #{fmlp_encoder.1} parent=11 // pred_check_branch
          %251 = sbr.rel (%p249) target = $region40
        $region39: #{fmlp_encoder.1} parent=11 // pred_region
          _
        $region40: #{fmlp_encoder.1} parent=11 // pred_fallthru
          _
      $region12: #{fmlp_encoder.1} parent=5 // pred_fallthru
        _
      %p252 = scmp.lt.s32.totalorder %s17, 2
      // Predicated region
      $region41: #{fmlp_encoder.1} parent=5 // pred_check
        %p253 = pneg %p252
      $region42: #{fmlp_encoder.1} parent=5 // pred_check_branch
        %255 = sbr.rel (%p253) target = $region44
      $region43: #{fmlp_encoder.1} parent=5 // pred_region
        // Predicated region
        $region45: #{fmlp_encoder.1} parent=43 // pred_check
          %p256 = pneg %p37
        $region46: #{fmlp_encoder.1} parent=43 // pred_check_branch
          %258 = sbr.rel (%p256) target = $region48
        $region47: #{fmlp_encoder.1} parent=43 // pred_region
          %s259 = smul.u32 2, %s17
          %p260 = scmp.lt.s32.totalorder %s259, 3
          %s261 = scalar_select %p260, %s259, 3
          %s262 = smul.addr %s261, 8
          %s263 = scalar_lea.vmem %s0, %s262
          %s264 = smul.u32 2, %s17
        $region48: #{fmlp_encoder.1} parent=43 // pred_fallthru
          _
      $region44: #{fmlp_encoder.1} parent=5 // pred_fallthru
        _
      %p265 = scmp.le.s32.totalorder 1, %s17
      %p266 = scmp.lt.s32.totalorder %s17, 3
      %p267 = pnand %p265, %p266
      %p268 = pneg %p267
      // Predicated region
      $region49: #{fmlp_encoder.1} parent=5 // pred_check
        _
      $region50: #{fmlp_encoder.1} parent=5 // pred_check_branch
        %270 = sbr.rel (%p267) target = $region52
      $region51: #{fmlp_encoder.1} parent=5 // pred_region
        %s271 = ssub.s32 %s17, 1
        %s272 = smul.u32 2, %s22
        %p273 = scmp.lt.s32.totalorder %s272, 3
        %s274 = scalar_select %p273, %s272, 3
        %s275 = smul.addr %s274, 8
        %s276 = scalar_lea.vmem %s0, %s275
        %p277 = pneg %p43
        %p278 = pneg %p40
        %p279 = pneg %p64
        %p280 = pneg %p61
        %p281 = pneg %p85
        %p282 = pneg %p82
        %p283 = pneg %p106
        %p284 = pneg %p103
        %p285 = pneg %p127
        %p286 = pneg %p124
        %p287 = pneg %p148
        %p288 = pneg %p145
        %p289 = pneg %p169
        %p290 = pneg %p166
        %p291 = pneg %p190
        %p292 = pneg %p187
        %p293 = pneg %p216
        %p294 = pneg %p213
        %s295 = sand.u32 %s203, 1
        %s296 = scalar_lea.sflag [#allocation3], %s295
        %s297 = sand.u32 %s203, 1
        %s298 = smul.addr %s297, 16
        %s299 = scalar_lea.vmem [#allocation2], %s298
        %s300 = smul.u32 2, %s22
        %p301 = scmp.lt.s32.totalorder %s300, 3
        %s302 = scalar_select %p301, %s300, 3
        %s303 = smul.addr %s302, 8
        %s304 = scalar_lea.vmem %s0, %s303
        %s305 = smul.u32 2, %s22
        %s306 = smul.u32 2, %s22
        %v307 = vld [vmem:[%s1] sm:$0xff]
        %v308 = vld [vmem:[%s1 + $0x8] sm:$0xff]
        %v309 = vld [vmem:[%s2] sm:$0xff]
        %v310 = vld [vmem:[%s3] sm:$0xff]
        %v311 = vld [vmem:[%s3 + $0x8] sm:$0xff]
        %s312 = scalar_lea.vmem %s3, 16
        %v313 = vld [vmem:[%s312] sm:$0xff]
        %v314 = vld [vmem:[%s312 + $0x8] sm:$0xff]
        %v315 = vld [vmem:[%s4] sm:$0xff]
        %v316 = vld [vmem:[%s4 + $0x8] sm:$0xff]
        %v317 = vld [vmem:[%s4 + $0x10] sm:$0xff]
        %v318 = vld [vmem:[%s4 + $0x18] sm:$0xff]
        %v319 = vld [vmem:[%s5] sm:$0x1]
        %v320 = vld [vmem:[%s6] sm:$0xff]
        %v321 = vld [vmem:[%s6 + $0x8] sm:$0xff]
        %v322 = vld [vmem:[%s6 + $0x10] sm:$0xff]
        %v323 = vld [vmem:[%s6 + $0x18] sm:$0xff]
        %v324 = vld [vmem:[%s6 + $0x20] sm:$0xff]
        %v325 = vld [vmem:[%s6 + $0x28] sm:$0xff]
        %v326 = vld [vmem:[%s6 + $0x30] sm:$0xff]
        %v327 = vld [vmem:[%s6 + $0x38] sm:$0xff]
        %v328 = vld [vmem:[%s6 + $0x40] sm:$0xff]
        %v329 = vld [vmem:[%s6 + $0x48] sm:$0xff]
        %v330 = vld [vmem:[%s6 + $0x50] sm:$0xff]
        %v331 = vld [vmem:[%s6 + $0x58] sm:$0xff]
        %v332 = vld [vmem:[%s6 + $0x60] sm:$0xff]
        %v333 = vld [vmem:[%s6 + $0x68] sm:$0xff]
        %v334 = vld [vmem:[%s6 + $0x70] sm:$0xff]
        %v335 = vld [vmem:[%s6 + $0x78] sm:$0xff]
        %v336 = vld [vmem:[%s7] sm:$0x1f]
        %v337 = vld [vmem:[%s304] sm:$0xff]
        %v338 = vld [vmem:[%s304 + $0x8] sm:$0xff]
        loop: start=0, step=1, limit=2
        $region53: #{fmlp_encoder.1} parent=51 // loop_pre_header
          _
        $region54: #{fmlp_encoder.1} parent=51 // loop_header
          %s340 = sphi 0, %s344
          %p341 = scmp.ge.s32.totalorder %s340, 2
          %v345 = vphi %v337, %v953
          %v346 = vphi %v338, %v954
        $region55: #{fmlp_encoder.1} parent=51 // loop_header_branch
          %343 = sbr.rel (%p341) target = $region59
        $region56: #{fmlp_encoder.1} parent=51 // loop_body
          %vm347 = vcmask 64512
          %v349 = vsel %vm347, %v307, 0
          %v352 = vsel %vm347, %v308, 0
          %354 = vmatprep.subr.mxu0 0.0
          %355 = vmatpush1.msra.mxu0 %v345
          %356 = vmatprep.subr.mxu0 0.0
          %357 = vmatpush1.msra.mxu0 0.0
          %358 = vmatprep.subr.mxu0 0.0
          %359 = vmatpush1.msra.mxu0 0.0
          %360 = vmatprep.subr.mxu0 0.0
          %361 = vmatpush1.msra.mxu0 0.0
          %362 = vmatprep.subr.mxu0 0.0
          %363 = vmatpush1.msra.mxu0 0.0
          %364 = vmatprep.subr.mxu0 0.0
          %365 = vmatpush1.msra.mxu0 0.0
          %366 = vmatprep.subr.mxu0 0.0
          %367 = vmatpush1.msra.mxu0 0.0
          %368 = vmatprep.subr.mxu0 0.0
          %369 = vmatpush1.msra.mxu0 0.0
          %370 = vmatprep.subr.mxu0 0.0
          %371 = vmatpush1.msra.mxu0 0.0
          %372 = vmatprep.subr.mxu0 0.0
          %373 = vmatpush1.msra.mxu0 0.0
          %374 = vmatprep.subr.mxu0 0.0
          %375 = vmatpush1.msra.mxu0 0.0
          %376 = vmatprep.subr.mxu0 0.0
          %377 = vmatpush1.msra.mxu0 0.0
          %378 = vmatprep.subr.mxu0 0.0
          %379 = vmatpush1.msra.mxu0 0.0
          %380 = vmatprep.subr.mxu0 0.0
          %381 = vmatpush1.msra.mxu0 0.0
          %382 = vmatprep.subr.mxu0 0.0
          %383 = vmatpush1.msra.mxu0 0.0
          %384 = vmatprep.subr.mxu0 0.0
          %385 = vmatpush1.msra.mxu0 0.0
          %386 = vmatprep.subr.mxu0 0.0
          %387 = vmatpush1.msra.mxu0 0.0
          %388 = vmatprep.subr.mxu0 0.0
          %389 = vmatpush1.msra.mxu0 0.0
          %390 = vmatprep.subr.mxu0 0.0
          %391 = vmatpush1.msra.mxu0 0.0
          %392 = vmatprep.subr.mxu0 0.0
          %393 = vmatpush1.msra.mxu0 0.0
          %394 = vmatprep.subr.mxu0 0.0
          %395 = vmatpush1.msra.mxu0 0.0
          %396 = vmatprep.subr.mxu0 0.0
          %397 = vmatpush1.msra.mxu0 0.0
          %398 = vmatprep.subr.mxu0 0.0
          %399 = vmatpush1.msra.mxu0 0.0
          %400 = vmatprep.subr.mxu0 0.0
          %401 = vmatpush1.msra.mxu0 0.0
          %402 = vmatprep.subr.mxu0 0.0
          %403 = vmatpush1.msra.mxu0 0.0
          %404 = vmatprep.subr.mxu0 0.0
          %405 = vmatpush1.msra.mxu0 0.0
          %406 = vmatprep.subr.mxu0 0.0
          %407 = vmatpush1.msra.mxu0 0.0
          %408 = vmatprep.subr.mxu0 0.0
          %409 = vmatpush1.msra.mxu0 0.0
          %410 = vmatprep.subr.mxu0 0.0
          %411 = vmatpush1.msra.mxu0 0.0
          %412 = vmatprep.subr.mxu0 0.0
          %413 = vmatpush1.msra.mxu0 0.0
          %414 = vmatprep.subr.mxu0 0.0
          %415 = vmatpush1.msra.mxu0 0.0
          %416 = vmatprep.subr.mxu0 0.0
          %417 = vmatpush1.msra.mxu0 0.0
          %418 = vmatprep.mubr.f32.mxu0 0.0
          %419 = vmatmul.mubr.f32.gmra.mrb[0].mxu0 %v349
          %v420 = vpop.f32.mrb[0].mxu0
          %v421 = vadd.f32 0.0, %v420
          %v422 = vpop.f32.mrb[0].mxu0
          %423 = vmatprep.mubr.f32.mxu0 0.0
          %424 = vmatmul.mubr.f32.gmra.mrb[0].mxu0 %v352
          %v425 = vpop.f32.mrb[0].mxu0
          %v426 = vadd.f32 0.0, %v425
          %v427 = vpop.f32.mrb[0].mxu0
          %428 = vdwg.mxu0
          %429 = vmatprep.subr.mxu0 0.0
          %430 = vmatpush1.msra.mxu0 %v346
          %431 = vmatprep.subr.mxu0 0.0
          %432 = vmatpush1.msra.mxu0 0.0
          %433 = vmatprep.subr.mxu0 0.0
          %434 = vmatpush1.msra.mxu0 0.0
          %435 = vmatprep.subr.mxu0 0.0
          %436 = vmatpush1.msra.mxu0 0.0
          %437 = vmatprep.subr.mxu0 0.0
          %438 = vmatpush1.msra.mxu0 0.0
          %439 = vmatprep.subr.mxu0 0.0
          %440 = vmatpush1.msra.mxu0 0.0
          %441 = vmatprep.subr.mxu0 0.0
          %442 = vmatpush1.msra.mxu0 0.0
          %443 = vmatprep.subr.mxu0 0.0
          %444 = vmatpush1.msra.mxu0 0.0
          %445 = vmatprep.subr.mxu0 0.0
          %446 = vmatpush1.msra.mxu0 0.0
          %447 = vmatprep.subr.mxu0 0.0
          %448 = vmatpush1.msra.mxu0 0.0
          %449 = vmatprep.subr.mxu0 0.0
          %450 = vmatpush1.msra.mxu0 0.0
          %451 = vmatprep.subr.mxu0 0.0
          %452 = vmatpush1.msra.mxu0 0.0
          %453 = vmatprep.subr.mxu0 0.0
          %454 = vmatpush1.msra.mxu0 0.0
          %455 = vmatprep.subr.mxu0 0.0
          %456 = vmatpush1.msra.mxu0 0.0
          %457 = vmatprep.subr.mxu0 0.0
          %458 = vmatpush1.msra.mxu0 0.0
          %459 = vmatprep.subr.mxu0 0.0
          %460 = vmatpush1.msra.mxu0 0.0
          %461 = vmatprep.subr.mxu0 0.0
          %462 = vmatpush1.msra.mxu0 0.0
          %463 = vmatprep.subr.mxu0 0.0
          %464 = vmatpush1.msra.mxu0 0.0
          %465 = vmatprep.subr.mxu0 0.0
          %466 = vmatpush1.msra.mxu0 0.0
          %467 = vmatprep.subr.mxu0 0.0
          %468 = vmatpush1.msra.mxu0 0.0
          %469 = vmatprep.subr.mxu0 0.0
          %470 = vmatpush1.msra.mxu0 0.0
          %471 = vmatprep.subr.mxu0 0.0
          %472 = vmatpush1.msra.mxu0 0.0
          %473 = vmatprep.subr.mxu0 0.0
          %474 = vmatpush1.msra.mxu0 0.0
          %475 = vmatprep.subr.mxu0 0.0
          %476 = vmatpush1.msra.mxu0 0.0
          %477 = vmatprep.subr.mxu0 0.0
          %478 = vmatpush1.msra.mxu0 0.0
          %479 = vmatprep.subr.mxu0 0.0
          %480 = vmatpush1.msra.mxu0 0.0
          %481 = vmatprep.subr.mxu0 0.0
          %482 = vmatpush1.msra.mxu0 0.0
          %483 = vmatprep.subr.mxu0 0.0
          %484 = vmatpush1.msra.mxu0 0.0
          %485 = vmatprep.subr.mxu0 0.0
          %486 = vmatpush1.msra.mxu0 0.0
          %487 = vmatprep.subr.mxu0 0.0
          %488 = vmatpush1.msra.mxu0 0.0
          %489 = vmatprep.subr.mxu0 0.0
          %490 = vmatpush1.msra.mxu0 0.0
          %491 = vmatprep.subr.mxu0 0.0
          %492 = vmatpush1.msra.mxu0 0.0
          %493 = vmatprep.mubr.f32.mxu0 0.0
          %494 = vmatmul.mubr.f32.gmra.mrb[0].mxu0 %v349
          %v495 = vpop.f32.mrb[0].mxu0
          %v496 = vadd.f32 0.0, %v495
          %v497 = vpop.f32.mrb[0].mxu0
          %498 = vmatprep.mubr.f32.mxu0 0.0
          %499 = vmatmul.mubr.f32.gmra.mrb[0].mxu0 %v352
          %v500 = vpop.f32.mrb[0].mxu0
          %v501 = vadd.f32 0.0, %v500
          %v502 = vpop.f32.mrb[0].mxu0
          %503 = vdwg.mxu0
          %v504 = vmul.f32 %v421, %v310
          %v505 = vmul.f32 %v426, %v311
          %v506 = vmul.f32 %v496, %v310
          %v507 = vmul.f32 %v501, %v311
          %v508 = vmul.f32 %v421, %v313
          %v509 = vmul.f32 %v426, %v314
          %v510 = vmul.f32 %v496, %v313
          %v511 = vmul.f32 %v501, %v314
          %vm512 = vcmask 261120
          %v514 = vsel %vm512, %v309, 0
          %516 = vmatprep.subr.mxu0 0.0
          %517 = vmatpush1.msra.mxu0 %v504
          %518 = vmatprep.subr.mxu0 0.0
          %519 = vmatpush1.msra.mxu0 %v505
          %520 = vmatprep.subr.mxu0 0.0
          %521 = vmatpush1.msra.mxu0 %v508
          %522 = vmatprep.subr.mxu0 0.0
          %523 = vmatpush1.msra.mxu0 %v509
          %524 = vmatprep.subr.mxu0 0.0
          %525 = vmatpush1.msra.mxu0 0.0
          %526 = vmatprep.subr.mxu0 0.0
          %527 = vmatpush1.msra.mxu0 0.0
          %528 = vmatprep.subr.mxu0 0.0
          %529 = vmatpush1.msra.mxu0 0.0
          %530 = vmatprep.subr.mxu0 0.0
          %531 = vmatpush1.msra.mxu0 0.0
          %532 = vmatprep.subr.mxu0 0.0
          %533 = vmatpush1.msra.mxu0 0.0
          %534 = vmatprep.subr.mxu0 0.0
          %535 = vmatpush1.msra.mxu0 0.0
          %536 = vmatprep.subr.mxu0 0.0
          %537 = vmatpush1.msra.mxu0 0.0
          %538 = vmatprep.subr.mxu0 0.0
          %539 = vmatpush1.msra.mxu0 0.0
          %540 = vmatprep.subr.mxu0 0.0
          %541 = vmatpush1.msra.mxu0 0.0
          %542 = vmatprep.subr.mxu0 0.0
          %543 = vmatpush1.msra.mxu0 0.0
          %544 = vmatprep.subr.mxu0 0.0
          %545 = vmatpush1.msra.mxu0 0.0
          %546 = vmatprep.subr.mxu0 0.0
          %547 = vmatpush1.msra.mxu0 0.0
          %548 = vmatprep.subr.mxu0 0.0
          %549 = vmatpush1.msra.mxu0 0.0
          %550 = vmatprep.subr.mxu0 0.0
          %551 = vmatpush1.msra.mxu0 0.0
          %552 = vmatprep.subr.mxu0 0.0
          %553 = vmatpush1.msra.mxu0 0.0
          %554 = vmatprep.subr.mxu0 0.0
          %555 = vmatpush1.msra.mxu0 0.0
          %556 = vmatprep.subr.mxu0 0.0
          %557 = vmatpush1.msra.mxu0 0.0
          %558 = vmatprep.subr.mxu0 0.0
          %559 = vmatpush1.msra.mxu0 0.0
          %560 = vmatprep.subr.mxu0 0.0
          %561 = vmatpush1.msra.mxu0 0.0
          %562 = vmatprep.subr.mxu0 0.0
          %563 = vmatpush1.msra.mxu0 0.0
          %564 = vmatprep.subr.mxu0 0.0
          %565 = vmatpush1.msra.mxu0 0.0
          %566 = vmatprep.subr.mxu0 0.0
          %567 = vmatpush1.msra.mxu0 0.0
          %568 = vmatprep.subr.mxu0 0.0
          %569 = vmatpush1.msra.mxu0 0.0
          %570 = vmatprep.subr.mxu0 0.0
          %571 = vmatpush1.msra.mxu0 0.0
          %572 = vmatprep.subr.mxu0 0.0
          %573 = vmatpush1.msra.mxu0 0.0
          %574 = vmatprep.subr.mxu0 0.0
          %575 = vmatpush1.msra.mxu0 0.0
          %576 = vmatprep.subr.mxu0 0.0
          %577 = vmatpush1.msra.mxu0 0.0
          %578 = vmatprep.subr.mxu0 0.0
          %579 = vmatpush1.msra.mxu0 0.0
          %580 = vmatprep.mubr.f32.mxu0 0.0
          %581 = vmatmul.mubr.f32.gmra.mrb[0].mxu0 %v514
          %v582 = vpop.f32.mrb[0].mxu0
          %v583 = vadd.f32 0.0, %v582
          %v584 = vpop.f32.mrb[0].mxu0
          %585 = vdwg.mxu0
          %586 = vmatprep.subr.mxu0 0.0
          %587 = vmatpush1.msra.mxu0 %v506
          %588 = vmatprep.subr.mxu0 0.0
          %589 = vmatpush1.msra.mxu0 %v507
          %590 = vmatprep.subr.mxu0 0.0
          %591 = vmatpush1.msra.mxu0 %v510
          %592 = vmatprep.subr.mxu0 0.0
          %593 = vmatpush1.msra.mxu0 %v511
          %594 = vmatprep.subr.mxu0 0.0
          %595 = vmatpush1.msra.mxu0 0.0
          %596 = vmatprep.subr.mxu0 0.0
          %597 = vmatpush1.msra.mxu0 0.0
          %598 = vmatprep.subr.mxu0 0.0
          %599 = vmatpush1.msra.mxu0 0.0
          %600 = vmatprep.subr.mxu0 0.0
          %601 = vmatpush1.msra.mxu0 0.0
          %602 = vmatprep.subr.mxu0 0.0
          %603 = vmatpush1.msra.mxu0 0.0
          %604 = vmatprep.subr.mxu0 0.0
          %605 = vmatpush1.msra.mxu0 0.0
          %606 = vmatprep.subr.mxu0 0.0
          %607 = vmatpush1.msra.mxu0 0.0
          %608 = vmatprep.subr.mxu0 0.0
          %609 = vmatpush1.msra.mxu0 0.0
          %610 = vmatprep.subr.mxu0 0.0
          %611 = vmatpush1.msra.mxu0 0.0
          %612 = vmatprep.subr.mxu0 0.0
          %613 = vmatpush1.msra.mxu0 0.0
          %614 = vmatprep.subr.mxu0 0.0
          %615 = vmatpush1.msra.mxu0 0.0
          %616 = vmatprep.subr.mxu0 0.0
          %617 = vmatpush1.msra.mxu0 0.0
          %618 = vmatprep.subr.mxu0 0.0
          %619 = vmatpush1.msra.mxu0 0.0
          %620 = vmatprep.subr.mxu0 0.0
          %621 = vmatpush1.msra.mxu0 0.0
          %622 = vmatprep.subr.mxu0 0.0
          %623 = vmatpush1.msra.mxu0 0.0
          %624 = vmatprep.subr.mxu0 0.0
          %625 = vmatpush1.msra.mxu0 0.0
          %626 = vmatprep.subr.mxu0 0.0
          %627 = vmatpush1.msra.mxu0 0.0
          %628 = vmatprep.subr.mxu0 0.0
          %629 = vmatpush1.msra.mxu0 0.0
          %630 = vmatprep.subr.mxu0 0.0
          %631 = vmatpush1.msra.mxu0 0.0
          %632 = vmatprep.subr.mxu0 0.0
          %633 = vmatpush1.msra.mxu0 0.0
          %634 = vmatprep.subr.mxu0 0.0
          %635 = vmatpush1.msra.mxu0 0.0
          %636 = vmatprep.subr.mxu0 0.0
          %637 = vmatpush1.msra.mxu0 0.0
          %638 = vmatprep.subr.mxu0 0.0
          %639 = vmatpush1.msra.mxu0 0.0
          %640 = vmatprep.subr.mxu0 0.0
          %641 = vmatpush1.msra.mxu0 0.0
          %642 = vmatprep.subr.mxu0 0.0
          %643 = vmatpush1.msra.mxu0 0.0
          %644 = vmatprep.subr.mxu0 0.0
          %645 = vmatpush1.msra.mxu0 0.0
          %646 = vmatprep.subr.mxu0 0.0
          %647 = vmatpush1.msra.mxu0 0.0
          %648 = vmatprep.subr.mxu0 0.0
          %649 = vmatpush1.msra.mxu0 0.0
          %650 = vmatprep.mubr.f32.mxu0 0.0
          %651 = vmatmul.mubr.f32.gmra.mrb[0].mxu0 %v514
          %v652 = vpop.f32.mrb[0].mxu0
          %v653 = vadd.f32 0.0, %v652
          %v654 = vpop.f32.mrb[0].mxu0
          %655 = vdwg.mxu0
          %v656 = vadd.f32 %v583, %v345
          %v657 = vadd.f32 %v653, %v346
          %v658 = vsel %vm512, %v656, 0.0
          %659 = vadd.xlane.f32.xlu0 %v658
          %v660 = vpop.xlane.xlu0 %659
          %v661 = vsel %vm512, %v657, 0.0
          %662 = vadd.xlane.f32.xlu0 %v661
          %v663 = vpop.xlane.xlu0 %662
          %v664 = vrcp.pop 32.0
          %v665 = vmul.f32 %v660, %v664
          %v666 = vmul.f32 %v663, %v664
          %v667 = vsub.f32 %v656, %v665
          %v668 = vsub.f32 %v657, %v666
          %v669 = vmul.f32 %v667, %v667
          %v670 = vmul.f32 %v668, %v668
          %v671 = vsel %vm512, %v669, 0.0
          %672 = vadd.xlane.f32.xlu0 %v671
          %v673 = vpop.xlane.xlu0 %672
          %v674 = vsel %vm512, %v670, 0.0
          %675 = vadd.xlane.f32.xlu0 %v674
          %v676 = vpop.xlane.xlu0 %675
          %v677 = vmul.f32 %v673, %v664
          %v678 = vmul.f32 %v676, %v664
          %v679 = vadd.f32 %v677, 1e-12
          %v680 = vadd.f32 %v678, 1e-12
          %v681 = vrsqrt.pop %v679
          %v682 = vrsqrt.pop %v680
          %v683 = vmul.f32 %v667, %v681
          %v684 = vmul.f32 %v668, %v682
          %v685 = vlaneseq
          %v686 = vshrl.u32 %v685, 7
          %v687 = vsub.s32 0, %v686
          %v688 = vrot.slane %v336, %v687
          %v689 = vmul.f32 %v688, %v683
          %v690 = vmul.f32 %v688, %v684
          %v691 = vlaneseq
          %v692 = vshrl.u32 %v691, 7
          %v693 = vsub.s32 1, %v692
          %v694 = vrot.slane %v336, %v693
          %v695 = vadd.f32 %v689, %v694
          %v696 = vadd.f32 %v690, %v694
          %v698 = vlaneseq
          %v699 = vshrl.u32 %v698, 7
          %v700 = vsub.s32 0, %v699
          %v701 = vrot.slane %v319, %v700
          %v704 = vsel %vm512, %v695, 0
          %v707 = vsel %vm512, %v696, 0
          %709 = vmatprep.subr.mxu0 0.0
          %710 = vmatpush1.msra.mxu0 %v315
          %711 = vmatprep.subr.mxu0 0.0
          %712 = vmatpush1.msra.mxu0 %v316
          %713 = vmatprep.subr.mxu0 0.0
          %714 = vmatpush1.msra.mxu0 %v317
          %715 = vmatprep.subr.mxu0 0.0
          %716 = vmatpush1.msra.mxu0 %v318
          %717 = vmatprep.subr.mxu0 0.0
          %718 = vmatpush1.msra.mxu0 0.0
          %719 = vmatprep.subr.mxu0 0.0
          %720 = vmatpush1.msra.mxu0 0.0
          %721 = vmatprep.subr.mxu0 0.0
          %722 = vmatpush1.msra.mxu0 0.0
          %723 = vmatprep.subr.mxu0 0.0
          %724 = vmatpush1.msra.mxu0 0.0
          %725 = vmatprep.subr.mxu0 0.0
          %726 = vmatpush1.msra.mxu0 0.0
          %727 = vmatprep.subr.mxu0 0.0
          %728 = vmatpush1.msra.mxu0 0.0
          %729 = vmatprep.subr.mxu0 0.0
          %730 = vmatpush1.msra.mxu0 0.0
          %731 = vmatprep.subr.mxu0 0.0
          %732 = vmatpush1.msra.mxu0 0.0
          %733 = vmatprep.subr.mxu0 0.0
          %734 = vmatpush1.msra.mxu0 0.0
          %735 = vmatprep.subr.mxu0 0.0
          %736 = vmatpush1.msra.mxu0 0.0
          %737 = vmatprep.subr.mxu0 0.0
          %738 = vmatpush1.msra.mxu0 0.0
          %739 = vmatprep.subr.mxu0 0.0
          %740 = vmatpush1.msra.mxu0 0.0
          %741 = vmatprep.subr.mxu0 0.0
          %742 = vmatpush1.msra.mxu0 0.0
          %743 = vmatprep.subr.mxu0 0.0
          %744 = vmatpush1.msra.mxu0 0.0
          %745 = vmatprep.subr.mxu0 0.0
          %746 = vmatpush1.msra.mxu0 0.0
          %747 = vmatprep.subr.mxu0 0.0
          %748 = vmatpush1.msra.mxu0 0.0
          %749 = vmatprep.subr.mxu0 0.0
          %750 = vmatpush1.msra.mxu0 0.0
          %751 = vmatprep.subr.mxu0 0.0
          %752 = vmatpush1.msra.mxu0 0.0
          %753 = vmatprep.subr.mxu0 0.0
          %754 = vmatpush1.msra.mxu0 0.0
          %755 = vmatprep.subr.mxu0 0.0
          %756 = vmatpush1.msra.mxu0 0.0
          %757 = vmatprep.subr.mxu0 0.0
          %758 = vmatpush1.msra.mxu0 0.0
          %759 = vmatprep.subr.mxu0 0.0
          %760 = vmatpush1.msra.mxu0 0.0
          %761 = vmatprep.subr.mxu0 0.0
          %762 = vmatpush1.msra.mxu0 0.0
          %763 = vmatprep.subr.mxu0 0.0
          %764 = vmatpush1.msra.mxu0 0.0
          %765 = vmatprep.subr.mxu0 0.0
          %766 = vmatpush1.msra.mxu0 0.0
          %767 = vmatprep.subr.mxu0 0.0
          %768 = vmatpush1.msra.mxu0 0.0
          %769 = vmatprep.subr.mxu0 0.0
          %770 = vmatpush1.msra.mxu0 0.0
          %771 = vmatprep.subr.mxu0 0.0
          %772 = vmatpush1.msra.mxu0 0.0
          %773 = vmatprep.mubr.f32.mxu0 0.0
          %774 = vmatmul.mubr.f32.gmra.mrb[0].mxu0 %v704
          %v775 = vpop.f32.mrb[0].mxu0
          %v776 = vadd.f32 %v701, %v775
          %v777 = vpop.f32.mrb[0].mxu0
          %778 = vmatprep.mubr.f32.mxu0 0.0
          %779 = vmatmul.mubr.f32.gmra.mrb[0].mxu0 %v707
          %v780 = vpop.f32.mrb[0].mxu0
          %v781 = vadd.f32 %v701, %v780
          %v782 = vpop.f32.mrb[0].mxu0
          %783 = vdwg.mxu0
          %v784 = vmul.f32 %v776, 0.5
          %v785 = vmul.f32 %v781, 0.5
          %v786 = vmul.f32 %v776, 0.70710677
          %v787 = vmul.f32 %v781, 0.70710677
          %vm788 = vcmp.ge.f32.partialorder %v786, 0.0
          %vm789 = vcmp.ge.f32.partialorder %v787, 0.0
          %v790 = vsel %vm788, 1.0, -1.0
          %v791 = vsel %vm789, 1.0, -1.0
          %v792 = vand.u32 2147483647, %v786
          %v793 = vand.u32 2147483647, %v787
          %v794 = vmul.f32 %v792, 0.3275911
          %v795 = vmul.f32 %v793, 0.3275911
          %v796 = vadd.f32 %v794, 1.0
          %v797 = vadd.f32 %v795, 1.0
          %v798 = vrcp.pop %v796
          %v799 = vrcp.pop %v797
          %v800 = vmul.f32 %v798, 1.0614054
          %v801 = vmul.f32 %v799, 1.0614054
          %v802 = vadd.f32 %v800, -1.4531521
          %v803 = vadd.f32 %v801, -1.4531521
          %v804 = vmul.f32 %v802, %v798
          %v805 = vmul.f32 %v803, %v799
          %v806 = vadd.f32 %v804, 1.4214138
          %v807 = vadd.f32 %v805, 1.4214138
          %v808 = vmul.f32 %v806, %v798
          %v809 = vmul.f32 %v807, %v799
          %v810 = vadd.f32 %v808, -0.28449672
          %v811 = vadd.f32 %v809, -0.28449672
          %v812 = vmul.f32 %v810, %v798
          %v813 = vmul.f32 %v811, %v799
          %v814 = vadd.f32 %v812, 0.2548296
          %v815 = vadd.f32 %v813, 0.2548296
          %v816 = vmul.f32 %v814, %v798
          %v817 = vmul.f32 %v815, %v799
          %v818 = vsub.f32 0.0, %v792
          %v819 = vsub.f32 0.0, %v793
          %v820 = vmul.f32 %v818, %v792
          %v821 = vmul.f32 %v819, %v793
          %v822 = vmul.f32 %v820, 1.442695
          %v823 = vpow.pop %v822
          %v824 = vmul.f32 %v821, 1.442695
          %v825 = vpow.pop %v824
          %v826 = vmul.f32 %v816, %v823
          %v827 = vmul.f32 %v817, %v825
          %v828 = vsub.f32 1.0, %v826
          %v829 = vsub.f32 1.0, %v827
          %v830 = vmul.f32 %v790, %v828
          %v831 = vmul.f32 %v791, %v829
          %v832 = vadd.f32 %v830, 1.0
          %v833 = vadd.f32 %v831, 1.0
          %v834 = vmul.f32 %v784, %v832
          %v835 = vmul.f32 %v785, %v833
          %v836 = vlaneseq
          %v837 = vshrl.u32 %v836, 7
          %v838 = vsub.s32 2, %v837
          %v839 = vrot.slane %v336, %v838
          %840 = vmatprep.subr.mxu0 0.0
          %841 = vmatpush1.msra.mxu0 %v320
          %842 = vmatprep.subr.mxu0 0.0
          %843 = vmatpush1.msra.mxu0 %v321
          %844 = vmatprep.subr.mxu0 0.0
          %845 = vmatpush1.msra.mxu0 %v322
          %846 = vmatprep.subr.mxu0 0.0
          %847 = vmatpush1.msra.mxu0 %v323
          %848 = vmatprep.subr.mxu0 0.0
          %849 = vmatpush1.msra.mxu0 %v324
          %850 = vmatprep.subr.mxu0 0.0
          %851 = vmatpush1.msra.mxu0 %v325
          %852 = vmatprep.subr.mxu0 0.0
          %853 = vmatpush1.msra.mxu0 %v326
          %854 = vmatprep.subr.mxu0 0.0
          %855 = vmatpush1.msra.mxu0 %v327
          %856 = vmatprep.subr.mxu0 0.0
          %857 = vmatpush1.msra.mxu0 %v328
          %858 = vmatprep.subr.mxu0 0.0
          %859 = vmatpush1.msra.mxu0 %v329
          %860 = vmatprep.subr.mxu0 0.0
          %861 = vmatpush1.msra.mxu0 %v330
          %862 = vmatprep.subr.mxu0 0.0
          %863 = vmatpush1.msra.mxu0 %v331
          %864 = vmatprep.subr.mxu0 0.0
          %865 = vmatpush1.msra.mxu0 %v332
          %866 = vmatprep.subr.mxu0 0.0
          %867 = vmatpush1.msra.mxu0 %v333
          %868 = vmatprep.subr.mxu0 0.0
          %869 = vmatpush1.msra.mxu0 %v334
          %870 = vmatprep.subr.mxu0 0.0
          %871 = vmatpush1.msra.mxu0 %v335
          %872 = vmatprep.subr.mxu0 0.0
          %873 = vmatpush1.msra.mxu0 0.0
          %874 = vmatprep.subr.mxu0 0.0
          %875 = vmatpush1.msra.mxu0 0.0
          %876 = vmatprep.subr.mxu0 0.0
          %877 = vmatpush1.msra.mxu0 0.0
          %878 = vmatprep.subr.mxu0 0.0
          %879 = vmatpush1.msra.mxu0 0.0
          %880 = vmatprep.subr.mxu0 0.0
          %881 = vmatpush1.msra.mxu0 0.0
          %882 = vmatprep.subr.mxu0 0.0
          %883 = vmatpush1.msra.mxu0 0.0
          %884 = vmatprep.subr.mxu0 0.0
          %885 = vmatpush1.msra.mxu0 0.0
          %886 = vmatprep.subr.mxu0 0.0
          %887 = vmatpush1.msra.mxu0 0.0
          %888 = vmatprep.subr.mxu0 0.0
          %889 = vmatpush1.msra.mxu0 0.0
          %890 = vmatprep.subr.mxu0 0.0
          %891 = vmatpush1.msra.mxu0 0.0
          %892 = vmatprep.subr.mxu0 0.0
          %893 = vmatpush1.msra.mxu0 0.0
          %894 = vmatprep.subr.mxu0 0.0
          %895 = vmatpush1.msra.mxu0 0.0
          %896 = vmatprep.subr.mxu0 0.0
          %897 = vmatpush1.msra.mxu0 0.0
          %898 = vmatprep.subr.mxu0 0.0
          %899 = vmatpush1.msra.mxu0 0.0
          %900 = vmatprep.subr.mxu0 0.0
          %901 = vmatpush1.msra.mxu0 0.0
          %902 = vmatprep.subr.mxu0 0.0
          %903 = vmatpush1.msra.mxu0 0.0
          %904 = vmatprep.mubr.f32.mxu0 0.0
          %905 = vmatmul.mubr.f32.gmra.mrb[0].mxu0 %v834
          %v906 = vpop.f32.mrb[0].mxu0
          %v907 = vadd.f32 %v839, %v906
          %v908 = vpop.f32.mrb[0].mxu0
          %909 = vmatprep.mubr.f32.mxu0 0.0
          %910 = vmatmul.mubr.f32.gmra.mrb[0].mxu0 %v835
          %v911 = vpop.f32.mrb[0].mxu0
          %v912 = vadd.f32 %v839, %v911
          %v913 = vpop.f32.mrb[0].mxu0
          %914 = vdwg.mxu0
          %v915 = vadd.f32 %v907, %v695
          %v916 = vadd.f32 %v912, %v696
          %v917 = vsel %vm512, %v915, 0.0
          %918 = vadd.xlane.f32.xlu0 %v917
          %v919 = vpop.xlane.xlu0 %918
          %v920 = vsel %vm512, %v916, 0.0
          %921 = vadd.xlane.f32.xlu0 %v920
          %v922 = vpop.xlane.xlu0 %921
          %v923 = vmul.f32 %v919, %v664
          %v924 = vmul.f32 %v922, %v664
          %v925 = vsub.f32 %v915, %v923
          %v926 = vsub.f32 %v916, %v924
          %v927 = vmul.f32 %v925, %v925
          %v928 = vmul.f32 %v926, %v926
          %v929 = vsel %vm512, %v927, 0.0
          %930 = vadd.xlane.f32.xlu0 %v929
          %v931 = vpop.xlane.xlu0 %930
          %v932 = vsel %vm512, %v928, 0.0
          %933 = vadd.xlane.f32.xlu0 %v932
          %v934 = vpop.xlane.xlu0 %933
          %v935 = vmul.f32 %v931, %v664
          %v936 = vmul.f32 %v934, %v664
          %v937 = vadd.f32 %v935, 1e-12
          %v938 = vadd.f32 %v936, 1e-12
          %v939 = vrsqrt.pop %v937
          %v940 = vrsqrt.pop %v938
          %v941 = vmul.f32 %v925, %v939
          %v942 = vmul.f32 %v926, %v940
          %v943 = vlaneseq
          %v944 = vshrl.u32 %v943, 7
          %v945 = vsub.s32 3, %v944
          %v946 = vrot.slane %v336, %v945
          %v947 = vmul.f32 %v946, %v941
          %v948 = vmul.f32 %v946, %v942
          %v949 = vlaneseq
          %v950 = vshrl.u32 %v949, 7
          %v951 = vsub.s32 4, %v950
          %v952 = vrot.slane %v336, %v951
          %v953 = vadd.f32 %v947, %v952
          %v954 = vadd.f32 %v948, %v952
        $region57: #{fmlp_encoder.1} parent=51 // loop_footer
          %s344 = sadd.s32 1, %s340
        $region58: #{fmlp_encoder.1} parent=51 // loop_footer_branch
          %339 = sbr.rel target = $region54
        $region59: #{fmlp_encoder.1} parent=51 // loop_exit
          _
        %vm955 = vcmask 261120
        %956 = vst.msk [vmem:[%s299] sm:$0xff] %vm955, %v345
        %957 = vst.msk [vmem:[%s299 + $0x8] sm:$0xff] %vm955, %v346
        %s958 = sand.u32 %s203, 1
        %s959 = scalar_lea.sflag [#allocation3], %s958
        %s960 = sand.u32 %s203, 1
        %s961 = smul.addr %s960, 16
        %s962 = scalar_lea.vmem [#allocation2], %s961
        // Predicated region
        $region60: #{fmlp_encoder.1} parent=51 // pred_check
          %p963 = pneg %p213
        $region61: #{fmlp_encoder.1} parent=51 // pred_check_branch
          %965 = sbr.rel (%p963) target = $region63
        $region62: #{fmlp_encoder.1} parent=51 // pred_region
          %s966 = smul.u32 2, %s22
          %s968 = ssub.s32 256, 256
          %969 = vsyncadd %s959, %s968
          %s970 = smul.addr %s966, 128
          %s971 = scalar_lea.hbm %s8, %s970
          %s972 = sshll.u32 %s962, 4
          %s973 = int_to_ptr.vmem [resolvable:$true] %s972
          %978 = dma.vmem_to_hbm [thread:$0]  %s973, 256, %s971, %s959, 128, 128, 8
        $region63: #{fmlp_encoder.1} parent=51 // pred_fallthru
          _
      $region52: #{fmlp_encoder.1} parent=5 // pred_fallthru
        _
      %p979 = scmp.le.s32.totalorder 2, %s17
      // Predicated region
      $region64: #{fmlp_encoder.1} parent=5 // pred_check
        %p980 = pneg %p979
      $region65: #{fmlp_encoder.1} parent=5 // pred_check_branch
        %982 = sbr.rel (%p980) target = $region67
      $region66: #{fmlp_encoder.1} parent=5 // pred_region
        %s983 = ssub.s32 %s17, 2
        // Predicated region
        $region68: #{fmlp_encoder.1} parent=66 // pred_check
          %p984 = pneg %p219
        $region69: #{fmlp_encoder.1} parent=66 // pred_check_branch
          %986 = sbr.rel (%p984) target = $region71
        $region70: #{fmlp_encoder.1} parent=66 // pred_region
          %s987 = sand.u32 %s204, 1
          %s988 = scalar_lea.sflag [#allocation3], %s987
          %s989 = sand.u32 %s204, 1
          %s990 = smul.addr %s989, 16
          %s991 = scalar_lea.vmem [#allocation2], %s990
          %992 = dma.done %s988, 256
        $region71: #{fmlp_encoder.1} parent=66 // pred_fallthru
          _
      $region67: #{fmlp_encoder.1} parent=5 // pred_fallthru
        _
    $region6: #{fmlp_encoder.1} parent=1 // loop_footer
      %s21 = sadd.s32 1, %s17
    $region7: #{fmlp_encoder.1} parent=1 // loop_footer_branch
      %16 = sbr.rel target = $region3
    $region8: #{fmlp_encoder.1} parent=1 // loop_exit
      _
    %993 = vsyncpa [#allocation3], 1
    %s994 = scalar_lea.sflag [#allocation3], 1
    %995 = vsyncpa %s994, 1

</llo_original>
